<compile_context>
chip_gen: v5e
topology: v5e:2x2
jax: 0.10.0
libtpu: 0.0.40
codegen_flags: <defaults>
</compile_context>

<pallas_src>
import jax
import jax.numpy as jnp
from jax.experimental import pallas as pl
from jax.experimental.pallas import tpu as pltpu


def dqn_kernel(x_ref, w1_ref, b1_ref, w2_ref, b2_ref, w3_ref, b3_ref, out_ref):
    # x_ref: (state_size, TM) in the compute dtype (bf16 by default).
    xT = x_ref[...]

    # fc1 + ReLU -> (24, TM); f32 accumulation / bias / ReLU.
    h1 = jnp.dot(w1_ref[...], xT, preferred_element_type=jnp.float32)
    h1 = jnp.maximum(h1 + b1_ref[...], 0.0)          # b1 is (24, 1) -> lane bcast

    # fc2 + ReLU -> (24, TM)
    h2 = jnp.dot(w2_ref[...], h1.astype(w2_ref.dtype),
                 preferred_element_type=jnp.float32)
    h2 = jnp.maximum(h2 + b2_ref[...], 0.0)

    # fc3 (no activation) -> (action_size, TM)
    y = jnp.dot(w3_ref[...], h2.astype(w3_ref.dtype),
                preferred_element_type=jnp.float32)
    y = y + b3_ref[...]

    out_ref[...] = y.astype(out_ref.dtype)


def _round_up(n, m):
    return ((n + m - 1) // m) * m


def dqn_forward(x, params, *, max_tile=8192, compute_dtype=jnp.bfloat16):
    """Fused DQN MLP forward pass.

    x: (batch, state_size) float32
    params: dict with w1 (24,S), b1 (24,1), w2 (24,24), b2 (24,1),
            w3 (A,24), b3 (A,1)  -- PyTorch (out_features, in_features) layout.
    returns: (batch, action_size) float32
    """
    batch, state_size = x.shape
    action_size = params["w3"].shape[0]

    LANE = 128
    # Pad batch only to lane alignment, then pick a tile that exactly divides
    # the padded batch (no ragged / masked tiles, no big wasted tiles).
    b_pad = _round_up(max(batch, 1), LANE)
    # >=2 grid steps whenever there is enough work so the "parallel" axis can
    # shard across both TensorCores on v7x (harmless on v5e/v6e).
    min_steps = 2 if b_pad >= 2 * LANE else 1
    n_steps = max(pl.cdiv(b_pad, max_tile), min_steps)
    tm = _round_up(pl.cdiv(b_pad, n_steps), LANE)
    b_pad = n_steps * tm

    # Layout plumbing (single fused XLA copy): transposed, lane-dense, bf16 x.
    xT = x.astype(compute_dtype).T
    if b_pad != batch:
        xT = jnp.pad(xT, ((0, 0), (0, b_pad - batch)))

    w1 = params["w1"].astype(compute_dtype)
    w2 = params["w2"].astype(compute_dtype)
    w3 = params["w3"].astype(compute_dtype)
    b1, b2, b3 = params["b1"], params["b2"], params["b3"]   # biases stay f32

    # Whole-array blocks with a constant index_map: fetched once, resident in
    # VMEM across every batch tile (block_shape == full dims, so the (8,128)
    # constraint does not apply to the tiny weights).
    def resident(a):
        return pl.BlockSpec(a.shape, lambda i: (0,) * a.ndim)

    out_t = pl.pallas_call(
        dqn_kernel,
        out_shape=jax.ShapeDtypeStruct((action_size, b_pad), jnp.float32),
        grid=(n_steps,),
        in_specs=[
            pl.BlockSpec((state_size, tm), lambda i: (0, i)),
            resident(w1), resident(b1),
            resident(w2), resident(b2),
            resident(w3), resident(b3),
        ],
        out_specs=pl.BlockSpec((action_size, tm), lambda i: (0, i)),
        compiler_params=pltpu.CompilerParams(
            dimension_semantics=("parallel",)),  # megacore split on v7x
    )(xT, w1, b1, w2, b2, w3, b3)

    # (A, b_pad) -> (batch, A)
    return out_t[:, :batch].T


def init_dqn_params(key, state_size, action_size, hidden=24):
    """PyTorch nn.Linear default init: U(-1/sqrt(fan_in), 1/sqrt(fan_in)).
    Weights stored as (out_features, in_features), biases as (out, 1)."""
    def linear(k, fan_in, fan_out):
        kw, kb = jax.random.split(k)
        bound = 1.0 / jnp.sqrt(jnp.float32(fan_in))
        w = jax.random.uniform(kw, (fan_out, fan_in), jnp.float32, -bound, bound)
        b = jax.random.uniform(kb, (fan_out, 1), jnp.float32, -bound, bound)
        return w, b

    k1, k2, k3 = jax.random.split(key, 3)
    w1, b1 = linear(k1, state_size, hidden)
    w2, b2 = linear(k2, hidden, hidden)
    w3, b3 = linear(k3, hidden, action_size)
    return {"w1": w1, "b1": b1, "w2": w2, "b2": b2, "w3": w3, "b3": b3}


def dqn_forward_ref(x, p, compute_dtype=jnp.float32):
    """Pure-JAX reference (mimics the kernel's bf16-input / f32-accumulate
    numerics when compute_dtype=bfloat16)."""
    def cd(a):
        return a.astype(compute_dtype).astype(jnp.float32)

    h = jnp.maximum(cd(x) @ cd(p["w1"]).T + p["b1"].T, 0.0)
    h = jnp.maximum(cd(h) @ cd(p["w2"]).T + p["b2"].T, 0.0)
    return cd(h) @ cd(p["w3"]).T + p["b3"].T


if __name__ == "__main__":
    key = jax.random.PRNGKey(0)
    k_params, k_x1, k_x2 = jax.random.split(key, 3)

    state_size = 16
    action_size = 4
    params = init_dqn_params(k_params, state_size, action_size)

    # --- f32 path, tiny batch (exercises the 2 -> 128 lane-pad path) --------
    batch = 2
    x = jax.random.normal(k_x1, (batch, state_size), dtype=jnp.float32)
    out_f32 = jax.block_until_ready(
        dqn_forward(x, params, compute_dtype=jnp.float32))
    ref_f32 = dqn_forward_ref(x, params, compute_dtype=jnp.float32)
    assert out_f32.shape == (batch, action_size)
    assert jnp.allclose(out_f32, ref_f32, atol=1e-5, rtol=1e-5), \
        "mismatch vs f32 reference (batch=2)"

    # --- default bf16 path, multi-tile grid (300 -> 384 lanes, 3 steps) -----
    batch2 = 300
    x2 = jax.random.normal(k_x2, (batch2, state_size), dtype=jnp.float32)
    out_bf16 = jax.block_until_ready(dqn_forward(x2, params, max_tile=128))
    ref_bf16 = dqn_forward_ref(x2, params, compute_dtype=jnp.bfloat16)
    assert out_bf16.shape == (batch2, action_size)
    assert jnp.allclose(out_bf16, ref_bf16, atol=2e-2, rtol=2e-2), \
        "mismatch vs bf16 reference (batch=300)"

    print("KERNEL_OK")
</pallas_src>

<mosaic_0001>
module attributes {stable_mosaic.version = 11 : i64} {
  func.func @dqn_kernel(%arg0: i32, %arg1: memref<16x128xf32, #tpu.memory_space<vmem>>, %arg2: memref<24x16xf32, #tpu.memory_space<vmem>>, %arg3: memref<24x1xf32, #tpu.memory_space<vmem>>, %arg4: memref<24x24xf32, #tpu.memory_space<vmem>>, %arg5: memref<24x1xf32, #tpu.memory_space<vmem>>, %arg6: memref<4x24xf32, #tpu.memory_space<vmem>>, %arg7: memref<4x1xf32, #tpu.memory_space<vmem>>, %arg8: memref<4x128xf32, #tpu.memory_space<vmem>>) attributes {dimension_semantics = [#tpu.dimension_semantics<parallel>], iteration_bounds = array<i64: 1>, scalar_prefetch = 0 : i64, scratch_operands = 0 : i64, tpu.core_type = #tpu.core_type<tc>, window_params = [{transform_indices = @transform_0, window_bounds = array<i64: 16, 128>}, {pipeline_mode = #tpu.pipeline_mode<synchronous>, transform_indices = @transform_1, window_bounds = array<i64: 24, 16>}, {pipeline_mode = #tpu.pipeline_mode<synchronous>, transform_indices = @transform_2, window_bounds = array<i64: 24, 1>}, {pipeline_mode = #tpu.pipeline_mode<synchronous>, transform_indices = @transform_3, window_bounds = array<i64: 24, 24>}, {pipeline_mode = #tpu.pipeline_mode<synchronous>, transform_indices = @transform_4, window_bounds = array<i64: 24, 1>}, {pipeline_mode = #tpu.pipeline_mode<synchronous>, transform_indices = @transform_5, window_bounds = array<i64: 4, 24>}, {pipeline_mode = #tpu.pipeline_mode<synchronous>, transform_indices = @transform_6, window_bounds = array<i64: 4, 1>}, {transform_indices = @transform_7, window_bounds = array<i64: 4, 128>}]} {
    %c0 = arith.constant 0 : index
    %c0_0 = arith.constant 0 : index
    %0 = vector.load %arg1[%c0, %c0_0] : memref<16x128xf32, #tpu.memory_space<vmem>>, vector<16x128xf32>
    %c0_1 = arith.constant 0 : index
    %c0_2 = arith.constant 0 : index
    %1 = vector.load %arg2[%c0_1, %c0_2] : memref<24x16xf32, #tpu.memory_space<vmem>>, vector<24x16xf32>
    %cst = arith.constant dense<0.000000e+00> : vector<24x128xf32>
    %2 = tpu.matmul %1, %0, %cst {dimension_numbers = #tpu.dot_dimension_numbers<[1], [0], [0], [1], [0, 0, 1, 1], [], []>} : vector<24x16xf32>, vector<16x128xf32>, vector<24x128xf32> -> vector<24x128xf32>
    %c0_3 = arith.constant 0 : index
    %c0_4 = arith.constant 0 : index
    %3 = vector.load %arg3[%c0_3, %c0_4] : memref<24x1xf32, #tpu.memory_space<vmem>>, vector<24x1xf32>
    %4 = vector.broadcast %3 : vector<24x1xf32> to vector<24x128xf32>
    %5 = arith.addf %2, %4 : vector<24x128xf32>
    %cst_5 = arith.constant 0.000000e+00 : f32
    %6 = vector.broadcast %cst_5 : f32 to vector<24x128xf32>
    %7 = arith.maximumf %5, %6 : vector<24x128xf32>
    %c0_6 = arith.constant 0 : index
    %c0_7 = arith.constant 0 : index
    %8 = vector.load %arg4[%c0_6, %c0_7] : memref<24x24xf32, #tpu.memory_space<vmem>>, vector<24x24xf32>
    %cst_8 = arith.constant dense<0.000000e+00> : vector<24x128xf32>
    %9 = tpu.matmul %8, %7, %cst_8 {dimension_numbers = #tpu.dot_dimension_numbers<[1], [0], [0], [1], [0, 0, 1, 1], [], []>} : vector<24x24xf32>, vector<24x128xf32>, vector<24x128xf32> -> vector<24x128xf32>
    %c0_9 = arith.constant 0 : index
    %c0_10 = arith.constant 0 : index
    %10 = vector.load %arg5[%c0_9, %c0_10] : memref<24x1xf32, #tpu.memory_space<vmem>>, vector<24x1xf32>
    %11 = vector.broadcast %10 : vector<24x1xf32> to vector<24x128xf32>
    %12 = arith.addf %9, %11 : vector<24x128xf32>
    %cst_11 = arith.constant 0.000000e+00 : f32
    %13 = vector.broadcast %cst_11 : f32 to vector<24x128xf32>
    %14 = arith.maximumf %12, %13 : vector<24x128xf32>
    %c0_12 = arith.constant 0 : index
    %c0_13 = arith.constant 0 : index
    %15 = vector.load %arg6[%c0_12, %c0_13] : memref<4x24xf32, #tpu.memory_space<vmem>>, vector<4x24xf32>
    %cst_14 = arith.constant dense<0.000000e+00> : vector<4x128xf32>
    %16 = tpu.matmul %15, %14, %cst_14 {dimension_numbers = #tpu.dot_dimension_numbers<[1], [0], [0], [1], [0, 0, 1, 1], [], []>} : vector<4x24xf32>, vector<24x128xf32>, vector<4x128xf32> -> vector<4x128xf32>
    %c0_15 = arith.constant 0 : index
    %c0_16 = arith.constant 0 : index
    %17 = vector.load %arg7[%c0_15, %c0_16] : memref<4x1xf32, #tpu.memory_space<vmem>>, vector<4x1xf32>
    %18 = vector.broadcast %17 : vector<4x1xf32> to vector<4x128xf32>
    %19 = arith.addf %16, %18 : vector<4x128xf32>
    %c0_17 = arith.constant 0 : index
    %c0_18 = arith.constant 0 : index
    %20 = vector.load %arg8[%c0_17, %c0_18] : memref<4x128xf32, #tpu.memory_space<vmem>>, vector<4x128xf32>
    tpu.vector_store %arg8[%c0_17, %c0_18], %19 {strides = array<i32>} : memref<4x128xf32, #tpu.memory_space<vmem>>, vector<4x128xf32>,
    return
  }
  func.func @transform_0(%arg0: i32) -> (i32, i32) {
    %c0_i32 = arith.constant 0 : i32
    %c0_i32_0 = arith.constant 0 : i32
    return %c0_i32, %arg0 : i32, i32
  }
  func.func @transform_1(%arg0: i32) -> (i32, i32) {
    %c0_i32 = arith.constant 0 : i32
    %c0_i32_0 = arith.constant 0 : i32
    %c0_i32_1 = arith.constant 0 : i32
    return %c0_i32, %c0_i32_0 : i32, i32
  }
  func.func @transform_2(%arg0: i32) -> (i32, i32) {
    %c0_i32 = arith.constant 0 : i32
    %c0_i32_0 = arith.constant 0 : i32
    %c0_i32_1 = arith.constant 0 : i32
    return %c0_i32, %c0_i32_0 : i32, i32
  }
  func.func @transform_3(%arg0: i32) -> (i32, i32) {
    %c0_i32 = arith.constant 0 : i32
    %c0_i32_0 = arith.constant 0 : i32
    %c0_i32_1 = arith.constant 0 : i32
    return %c0_i32, %c0_i32_0 : i32, i32
  }
  func.func @transform_4(%arg0: i32) -> (i32, i32) {
    %c0_i32 = arith.constant 0 : i32
    %c0_i32_0 = arith.constant 0 : i32
    %c0_i32_1 = arith.constant 0 : i32
    return %c0_i32, %c0_i32_0 : i32, i32
  }
  func.func @transform_5(%arg0: i32) -> (i32, i32) {
    %c0_i32 = arith.constant 0 : i32
    %c0_i32_0 = arith.constant 0 : i32
    %c0_i32_1 = arith.constant 0 : i32
    return %c0_i32, %c0_i32_0 : i32, i32
  }
  func.func @transform_6(%arg0: i32) -> (i32, i32) {
    %c0_i32 = arith.constant 0 : i32
    %c0_i32_0 = arith.constant 0 : i32
    %c0_i32_1 = arith.constant 0 : i32
    return %c0_i32, %c0_i32_0 : i32, i32
  }
  func.func @transform_7(%arg0: i32) -> (i32, i32) {
    %c0_i32 = arith.constant 0 : i32
    %c0_i32_0 = arith.constant 0 : i32
    return %c0_i32, %arg0 : i32, i32
  }
}

</mosaic_0001>

<llo_original>
// kernel: tpu_custom_call.1
$region0: #{tpu_custom_call.1}
  #allocation0 [shape = 'u32[]', space=smem, size = 0x4, offset = 0x4, fixed_abs, tag = 'smem constant byte address 0x4 - core index']
  #allocation1 [shape = 'u32[72,128]{1,0:T(1,128)}', space=vmem, size = 0x9000, scoped, tag = 'internal scratch']
  %s0 = inlined_call_operand.vmem [shape: f32[16,128], index: 0, kind: input, shape index: {}]
  %s1 = inlined_call_operand.vmem [shape: f32[24,16], index: 1, kind: input, shape index: {}]
  %s2 = inlined_call_operand.vmem [shape: f32[24,1], index: 2, kind: input, shape index: {}]
  %s3 = inlined_call_operand.vmem [shape: f32[24,24], index: 3, kind: input, shape index: {}]
  %s4 = inlined_call_operand.vmem [shape: f32[24,1], index: 4, kind: input, shape index: {}]
  %s5 = inlined_call_operand.vmem [shape: f32[4,24], index: 5, kind: input, shape index: {}]
  %s6 = inlined_call_operand.vmem [shape: f32[4,1], index: 6, kind: input, shape index: {}]
  %s7 = inlined_call_operand.hbm [shape: f32[4,128], index: 7, kind: output, shape index: {}]
  %s8 = sld [smem:[#allocation0]]
  $region38: #{tpu_custom_call.1} parent=0
    _
  %s10 = ssub.s32 1, %s8
  %s11 = scalar_select 0, %s10, %s8
  $region1: #{tpu_custom_call.1} parent=0
    #allocation2 [shape = 'u8[2048]{0}', space=vmem, size = 0x800, scoped, tag = 'output window, operand 0, single buffered']
    #allocation3 [shape = 's32[1]{0}', space=sflag, size = 0x4, scoped, tag = 'scoped memory for tpu_custom_call.1']
    %12 = vsyncpa [#allocation3], 0
    // Predicated region
    $region2: #{tpu_custom_call.1} parent=1 // pred_check
      _
    $region3: #{tpu_custom_call.1} parent=1 // pred_check_branch
      %14 = sbr.rel (0) target = $region5
    $region4: #{tpu_custom_call.1} parent=1 // pred_region
      _
    $region5: #{tpu_custom_call.1} parent=1 // pred_fallthru
      _
    // Predicated region
    $region6: #{tpu_custom_call.1} parent=1 // pred_check
      _
    $region7: #{tpu_custom_call.1} parent=1 // pred_check_branch
      %16 = sbr.rel (0) target = $region9
    $region8: #{tpu_custom_call.1} parent=1 // pred_region
      _
    $region9: #{tpu_custom_call.1} parent=1 // pred_fallthru
      _
    // Predicated region
    $region10: #{tpu_custom_call.1} parent=1 // pred_check
      _
    $region11: #{tpu_custom_call.1} parent=1 // pred_check_branch
      %18 = sbr.rel (0) target = $region13
    $region12: #{tpu_custom_call.1} parent=1 // pred_region
      _
    $region13: #{tpu_custom_call.1} parent=1 // pred_fallthru
      _
    // Predicated region
    $region14: #{tpu_custom_call.1} parent=1 // pred_check
      _
    $region15: #{tpu_custom_call.1} parent=1 // pred_check_branch
      %20 = sbr.rel (0) target = $region17
    $region16: #{tpu_custom_call.1} parent=1 // pred_region
      _
    $region17: #{tpu_custom_call.1} parent=1 // pred_fallthru
      _
    // Predicated region
    $region18: #{tpu_custom_call.1} parent=1 // pred_check
      _
    $region19: #{tpu_custom_call.1} parent=1 // pred_check_branch
      %22 = sbr.rel (0) target = $region21
    $region20: #{tpu_custom_call.1} parent=1 // pred_region
      _
    $region21: #{tpu_custom_call.1} parent=1 // pred_fallthru
      _
    // Predicated region
    $region22: #{tpu_custom_call.1} parent=1 // pred_check
      _
    $region23: #{tpu_custom_call.1} parent=1 // pred_check_branch
      %24 = sbr.rel (0) target = $region25
    $region24: #{tpu_custom_call.1} parent=1 // pred_region
      _
    $region25: #{tpu_custom_call.1} parent=1 // pred_fallthru
      _
    // Predicated region
    $region26: #{tpu_custom_call.1} parent=1 // pred_check
      _
    $region27: #{tpu_custom_call.1} parent=1 // pred_check_branch
      %26 = sbr.rel (0) target = $region29
    $region28: #{tpu_custom_call.1} parent=1 // pred_region
      _
    $region29: #{tpu_custom_call.1} parent=1 // pred_fallthru
      _
    %v27 = vld [vmem:[%s0] sm:$0xff]
    %v28 = vld [vmem:[%s0 + $0x8] sm:$0xff]
    %v29 = vld [vmem:[%s1] sm:$0xff]
    %v30 = vld [vmem:[%s1 + $0x8] sm:$0xff]
    %v31 = vld [vmem:[%s1 + $0x10] sm:$0xff]
    %v32 = vld [vmem:[%s2] sm:$0xff]
    %v33 = vld [vmem:[%s2 + $0x8] sm:$0xff]
    %v34 = vld [vmem:[%s2 + $0x10] sm:$0xff]
    %36 = vset.pattern.permute.xlu0 0
    %37 = vperm.xlu0 %36, %v32
    %v38 = vpop.permute.xlu0 %37
    %41 = vset.pattern.permute.xlu0 0
    %42 = vperm.xlu0 %41, %v33
    %v43 = vpop.permute.xlu0 %42
    %46 = vset.pattern.permute.xlu0 0
    %47 = vperm.xlu0 %46, %v34
    %v48 = vpop.permute.xlu0 %47
    %vm50 = vcmask 130048
    %v52 = vsel %vm50, %v29, 0
    %v55 = vsel %vm50, %v30, 0
    %v58 = vsel %vm50, %v31, 0
    %60 = vmatpush.msra.mxu0 0.0
    %61 = vmatpush.msra.mxu0 0.0
    %62 = vmatpush.msra.mxu0 0.0
    %63 = vmatpush.msra.mxu0 0.0
    %64 = vmatpush.msra.mxu0 0.0
    %65 = vmatpush.msra.mxu0 0.0
    %66 = vmatpush.msra.mxu0 0.0
    %67 = vmatpush.msra.mxu0 0.0
    %68 = vmatpush.msra.mxu0 0.0
    %69 = vmatpush.msra.mxu0 0.0
    %70 = vmatpush.msra.mxu0 0.0
    %71 = vmatpush.msra.mxu0 0.0
    %72 = vmatpush.msra.mxu0 0.0
    %73 = vmatpush.msra.mxu0 0.0
    %74 = vmatpush.msra.mxu0 %v28
    %75 = vmatpush.msra.mxu0 %v27
    %76 = vmatmul.f32.gmra.mxu0 %v52
    %v77 = vpop.f32.mrf.mxu0
    %v78 = vadd.f32 %v38, %v77
    %79 = vmatmul.f32.gmra.mxu0 %v55
    %v80 = vpop.f32.mrf.mxu0
    %v81 = vadd.f32 %v43, %v80
    %82 = vmatmul.f32.gmra.mxu0 %v58
    %v83 = vpop.f32.mrf.mxu0
    %v84 = vadd.f32 %v48, %v83
    %85 = vdwg.mxu0
    %v86 = vmax.f32 %v78, 0.0
    %v87 = vmax.f32 %v81, 0.0
    %v88 = vmax.f32 %v84, 0.0
    %v89 = vld [vmem:[%s3] sm:$0xff]
    %v90 = vld [vmem:[%s3 + $0x8] sm:$0xff]
    %v91 = vld [vmem:[%s3 + $0x10] sm:$0xff]
    %v92 = vld [vmem:[%s4] sm:$0xff]
    %v93 = vld [vmem:[%s4 + $0x8] sm:$0xff]
    %v94 = vld [vmem:[%s4 + $0x10] sm:$0xff]
    %96 = vset.pattern.permute.xlu0 0
    %97 = vperm.xlu0 %96, %v92
    %v98 = vpop.permute.xlu0 %97
    %101 = vset.pattern.permute.xlu0 0
    %102 = vperm.xlu0 %101, %v93
    %v103 = vpop.permute.xlu0 %102
    %106 = vset.pattern.permute.xlu0 0
    %107 = vperm.xlu0 %106, %v94
    %v108 = vpop.permute.xlu0 %107
    %vm110 = vcmask 195584
    %v112 = vsel %vm110, %v89, 0
    %v115 = vsel %vm110, %v90, 0
    %v118 = vsel %vm110, %v91, 0
    %120 = vmatpush.msra.mxu0 0.0
    %121 = vmatpush.msra.mxu0 0.0
    %122 = vmatpush.msra.mxu0 0.0
    %123 = vmatpush.msra.mxu0 0.0
    %124 = vmatpush.msra.mxu0 0.0
    %125 = vmatpush.msra.mxu0 0.0
    %126 = vmatpush.msra.mxu0 0.0
    %127 = vmatpush.msra.mxu0 0.0
    %128 = vmatpush.msra.mxu0 0.0
    %129 = vmatpush.msra.mxu0 0.0
    %130 = vmatpush.msra.mxu0 0.0
    %131 = vmatpush.msra.mxu0 0.0
    %132 = vmatpush.msra.mxu0 0.0
    %133 = vmatpush.msra.mxu0 %v88
    %134 = vmatpush.msra.mxu0 %v87
    %135 = vmatpush.msra.mxu0 %v86
    %136 = vmatmul.f32.gmra.mxu0 %v112
    %v137 = vpop.f32.mrf.mxu0
    %v138 = vadd.f32 %v98, %v137
    %139 = vmatmul.f32.gmra.mxu0 %v115
    %v140 = vpop.f32.mrf.mxu0
    %v141 = vadd.f32 %v103, %v140
    %142 = vmatmul.f32.gmra.mxu0 %v118
    %v143 = vpop.f32.mrf.mxu0
    %v144 = vadd.f32 %v108, %v143
    %145 = vdwg.mxu0
    %v146 = vmax.f32 %v138, 0.0
    %v147 = vmax.f32 %v141, 0.0
    %v148 = vmax.f32 %v144, 0.0
    %v149 = vld [vmem:[%s5] sm:$0xf]
    %v150 = vld [vmem:[%s6] sm:$0xf]
    %152 = vset.pattern.permute.xlu0 0
    %153 = vperm.xlu0 %152, %v150
    %v154 = vpop.permute.xlu0 %153
    %v157 = vsel %vm110, %v149, 0
    %159 = vmatpush.msra.mxu0 0.0
    %160 = vmatpush.msra.mxu0 0.0
    %161 = vmatpush.msra.mxu0 0.0
    %162 = vmatpush.msra.mxu0 0.0
    %163 = vmatpush.msra.mxu0 0.0
    %164 = vmatpush.msra.mxu0 0.0
    %165 = vmatpush.msra.mxu0 0.0
    %166 = vmatpush.msra.mxu0 0.0
    %167 = vmatpush.msra.mxu0 0.0
    %168 = vmatpush.msra.mxu0 0.0
    %169 = vmatpush.msra.mxu0 0.0
    %170 = vmatpush.msra.mxu0 0.0
    %171 = vmatpush.msra.mxu0 0.0
    %172 = vmatpush.msra.mxu0 %v148
    %173 = vmatpush.msra.mxu0 %v147
    %174 = vmatpush.msra.mxu0 %v146
    %175 = vmatmul.f32.gmra.mxu0 %v157
    %v176 = vpop.f32.mrf.mxu0
    %v177 = vadd.f32 %v154, %v176
    %178 = vdwg.mxu0
    %179 = vst [vmem:[#allocation2] sm:$0xf] %v177
    // Predicated region
    $region30: #{tpu_custom_call.1} parent=1 // pred_check
      _
    $region31: #{tpu_custom_call.1} parent=1 // pred_check_branch
      %181 = sbr.rel (0) target = $region33
    $region32: #{tpu_custom_call.1} parent=1 // pred_region
      %183 = vsyncadd [#allocation3], 0
      %s185 = sshll.u32 [#allocation2], 4
      %s186 = int_to_ptr.vmem [resolvable:$true] %s185
      %s187 = sshll.u32 %s7, 4
      %s188 = int_to_ptr.hbm [resolvable:$true] %s187
      %190 = dma.vmem_to_hbm [thread:$0]  %s186, 64, %s188, [#allocation3]
    $region33: #{tpu_custom_call.1} parent=1 // pred_fallthru
      _
    // Predicated region
    $region34: #{tpu_custom_call.1} parent=1 // pred_check
      _
    $region35: #{tpu_custom_call.1} parent=1 // pred_check_branch
      %192 = sbr.rel (0) target = $region37
    $region36: #{tpu_custom_call.1} parent=1 // pred_region
      %194 = dma.done [#allocation3], 64
    $region37: #{tpu_custom_call.1} parent=1 // pred_fallthru
      _
    %195 = vsyncpa [#allocation3], 1

</llo_original>
